<compile_context>
chip_gen: v7x
topology: tpu7x:2x2x1
jax: 0.10.0
libtpu: 0.0.40
codegen_flags: <defaults>
</compile_context>

<pallas_src>
import jax
import jax.numpy as jnp
from jax.experimental import pallas as pl
from jax.experimental.pallas import tpu as pltpu


# ---------------------------------------------------------------------------
# Fused DiffusionEmbedding kernel: one-hot gather (MXU) + (Linear, SiLU) x 2
# ---------------------------------------------------------------------------
def _diffusion_embedding_kernel(step_ref,          # VMEM (B, 1) int32
                                table_ref,         # VMEM (S, D) bf16 sinusoidal buffer
                                w1_ref, b1_ref,    # (D, P) bf16, (1, P) f32
                                w2_ref, b2_ref,    # (P, P) bf16, (1, P) f32
                                o_ref):            # (B, P) f32
    f32 = jnp.float32
    bf16 = jnp.bfloat16

    B = step_ref.shape[0]
    S = table_ref.shape[0]

    # ---- embedding[diffusion_step] as a one-hot matmul on the MXU --------------
    steps = step_ref[...]                                            # (B, 1) int32
    iota_s = jax.lax.broadcasted_iota(jnp.int32, (B, S), 1)          # (B, S)
    onehot = (iota_s == steps).astype(bf16)                          # (B, S) bf16
    x = jnp.dot(onehot, table_ref[...], preferred_element_type=f32)  # (B, D) f32

    # ---- projection1 + SiLU (bf16 MXU inputs, f32 accumulate, f32 elementwise) --
    h = jnp.dot(x.astype(bf16), w1_ref[...], preferred_element_type=f32) + b1_ref[...]
    h = h * jax.nn.sigmoid(h)

    # ---- projection2 + SiLU ------------------------------------------------------
    y = jnp.dot(h.astype(bf16), w2_ref[...], preferred_element_type=f32) + b2_ref[...]
    y = y * jax.nn.sigmoid(y)

    o_ref[...] = y.astype(o_ref.dtype)


def diffusion_embedding_forward(params, diffusion_step):
    """diffusion_step: (B,) int -> (B, projection_dim) f32, single fused pallas_call."""
    table = params["table"]                  # (S, D) f32 sinusoidal buffer
    w1, b1 = params["proj1"]                 # (D, P), (1, P)   weights stored (in, out)
    w2, b2 = params["proj2"]                 # (P, P), (1, P)

    B = int(diffusion_step.shape[0])
    S, D = table.shape
    P = w1.shape[1]

    # Clamp indices (PyTorch would raise on OOB; here OOB would select a zero row).
    steps_col = jnp.clip(diffusion_step.astype(jnp.int32), 0, S - 1).reshape(B, 1)

    # bf16 MXU operands; biases stay f32 (added into the f32 accumulator).
    table_bf16 = table.astype(jnp.bfloat16)
    w1_bf16 = w1.astype(jnp.bfloat16)
    w2_bf16 = w2.astype(jnp.bfloat16)
    b1_f32 = b1.astype(jnp.float32)
    b2_f32 = b2.astype(jnp.float32)

    flops = 2 * B * S * D + 2 * B * D * P + 2 * B * P * P
    transcendentals = 2 * B * P
    bytes_accessed = (B * 1 * 4            # step indices
                      + S * D * 2          # table (bf16)
                      + D * P * 2 + P * 4  # W1 (bf16) + b1 (f32)
                      + P * P * 2 + P * 4  # W2 (bf16) + b2 (f32)
                      + B * P * 4)         # output (f32)

    return pl.pallas_call(
        _diffusion_embedding_kernel,
        grid=(1,),                                           # whole batch, one tile
        in_specs=[
            pl.BlockSpec((B, 1), lambda i: (0, 0)),          # step indices
            pl.BlockSpec((S, D), lambda i: (0, 0)),          # sinusoidal table
            pl.BlockSpec((D, P), lambda i: (0, 0)),          # W1
            pl.BlockSpec((1, P), lambda i: (0, 0)),          # b1
            pl.BlockSpec((P, P), lambda i: (0, 0)),          # W2
            pl.BlockSpec((1, P), lambda i: (0, 0)),          # b2
        ],
        out_specs=pl.BlockSpec((B, P), lambda i: (0, 0)),
        out_shape=jax.ShapeDtypeStruct((B, P), jnp.float32),
        compiler_params=pltpu.CompilerParams(
            dimension_semantics=("arbitrary",)),
        cost_estimate=pl.CostEstimate(
            flops=flops,
            transcendentals=transcendentals,
            bytes_accessed=bytes_accessed),
    )(steps_col, table_bf16, w1_bf16, b1_f32, w2_bf16, b2_f32)


# ---------------------------------------------------------------------------
# Parameter init (deterministic, synthetic) + pure-JAX f32 reference
# ---------------------------------------------------------------------------
def init_params(key, num_steps, embedding_dim=128, projection_dim=None):
    if projection_dim is None:
        projection_dim = embedding_dim
    k1, k2 = jax.random.split(key)

    def lin(k, i, o, wscale=0.05, bscale=0.01):
        kw, kb = jax.random.split(k)
        w = jax.random.normal(kw, (i, o), jnp.float32) * wscale     # (in, out) layout
        b = jax.random.normal(kb, (1, o), jnp.float32) * bscale
        return (w, b)

    # _build_embedding(num_steps, embedding_dim / 2)
    half = embedding_dim // 2
    steps = jnp.arange(num_steps, dtype=jnp.float32)[:, None]
    freqs = (10.0 ** (jnp.arange(half, dtype=jnp.float32) / (half - 1) * 4.0))[None, :]
    tab = steps * freqs
    table = jnp.concatenate([jnp.sin(tab), jnp.cos(tab)], axis=1)   # (num_steps, emb_dim)

    return {
        "table": table,
        "proj1": lin(k1, embedding_dim, projection_dim),
        "proj2": lin(k2, projection_dim, projection_dim),
    }


def diffusion_embedding_ref(params, diffusion_step):
    x = params["table"][diffusion_step]
    w1, b1 = params["proj1"]
    w2, b2 = params["proj2"]
    x = jax.nn.silu(jnp.dot(x, w1) + b1)
    x = jax.nn.silu(jnp.dot(x, w2) + b2)
    return x


# ---------------------------------------------------------------------------
if __name__ == "__main__":
    num_steps = 50
    embedding_dim = 128     # PyTorch default
    projection_dim = 128
    B = 8                   # fills the 8-sublane axis of one vreg

    key = jax.random.PRNGKey(0)
    kp, ks = jax.random.split(key)
    params = init_params(kp, num_steps, embedding_dim, projection_dim)
    diffusion_step = jax.random.randint(ks, (B,), 0, num_steps, dtype=jnp.int32)

    out = diffusion_embedding_forward(params, diffusion_step)
    out = jax.block_until_ready(out)

    ref = diffusion_embedding_ref(params, diffusion_step)
    assert out.shape == (B, projection_dim), out.shape
    assert bool(jnp.all(jnp.isfinite(out)))
    assert bool(jnp.allclose(out, ref, atol=2e-2, rtol=2e-2)), \
        float(jnp.max(jnp.abs(out - ref)))
    print("KERNEL_OK")
</pallas_src>

<mosaic_0001>
module attributes {stable_mosaic.version = 11 : i64} {
  func.func @_diffusion_embedding_kernel(%arg0: i32, %arg1: memref<8x1xi32, #tpu.memory_space<vmem>>, %arg2: memref<50x128xbf16, #tpu.memory_space<vmem>>, %arg3: memref<128x128xbf16, #tpu.memory_space<vmem>>, %arg4: memref<1x128xf32, #tpu.memory_space<vmem>>, %arg5: memref<128x128xbf16, #tpu.memory_space<vmem>>, %arg6: memref<1x128xf32, #tpu.memory_space<vmem>>, %arg7: memref<8x128xf32, #tpu.memory_space<vmem>>) attributes {dimension_semantics = [#tpu.dimension_semantics<arbitrary>], iteration_bounds = array<i64: 1>, scalar_prefetch = 0 : i64, scratch_operands = 0 : i64, tpu.core_type = #tpu.core_type<tc>, window_params = [{pipeline_mode = #tpu.pipeline_mode<synchronous>, transform_indices = @transform_0, window_bounds = array<i64: 8, 1>}, {pipeline_mode = #tpu.pipeline_mode<synchronous>, transform_indices = @transform_1, window_bounds = array<i64: 50, 128>}, {pipeline_mode = #tpu.pipeline_mode<synchronous>, transform_indices = @transform_2, window_bounds = array<i64: 128, 128>}, {pipeline_mode = #tpu.pipeline_mode<synchronous>, transform_indices = @transform_3, window_bounds = array<i64: 1, 128>}, {pipeline_mode = #tpu.pipeline_mode<synchronous>, transform_indices = @transform_4, window_bounds = array<i64: 128, 128>}, {pipeline_mode = #tpu.pipeline_mode<synchronous>, transform_indices = @transform_5, window_bounds = array<i64: 1, 128>}, {pipeline_mode = #tpu.pipeline_mode<synchronous>, transform_indices = @transform_6, window_bounds = array<i64: 8, 128>}]} {
    %c0 = arith.constant 0 : index
    %c0_0 = arith.constant 0 : index
    %0 = vector.load %arg1[%c0, %c0_0] : memref<8x1xi32, #tpu.memory_space<vmem>>, vector<8x1xi32>
    %1 = tpu.iota {dimensions = array<i32: 1>} : vector<8x50xi32>
    %2 = vector.broadcast %0 : vector<8x1xi32> to vector<8x50xi32>
    %3 = arith.cmpi eq, %1, %2 : vector<8x50xi32>
    %4 = arith.extui %3 : vector<8x50xi1> to vector<8x50xi32>
    %5 = arith.sitofp %4 : vector<8x50xi32> to vector<8x50xf32>
    %6 = arith.truncf %5 : vector<8x50xf32> to vector<8x50xbf16>
    %c0_1 = arith.constant 0 : index
    %c0_2 = arith.constant 0 : index
    %7 = vector.load %arg2[%c0_1, %c0_2] : memref<50x128xbf16, #tpu.memory_space<vmem>>, vector<50x128xbf16>
    %cst = arith.constant dense<0.000000e+00> : vector<8x128xf32>
    %8 = tpu.matmul %6, %7, %cst {dimension_numbers = #tpu.dot_dimension_numbers<[1], [0], [0], [1], [0, 0, 1, 1], [], []>} : vector<8x50xbf16>, vector<50x128xbf16>, vector<8x128xf32> -> vector<8x128xf32>
    %9 = arith.truncf %8 : vector<8x128xf32> to vector<8x128xbf16>
    %c0_3 = arith.constant 0 : index
    %c0_4 = arith.constant 0 : index
    %10 = vector.load %arg3[%c0_3, %c0_4] : memref<128x128xbf16, #tpu.memory_space<vmem>>, vector<128x128xbf16>
    %cst_5 = arith.constant dense<0.000000e+00> : vector<8x128xf32>
    %11 = tpu.matmul %9, %10, %cst_5 {dimension_numbers = #tpu.dot_dimension_numbers<[1], [0], [0], [1], [0, 0, 1, 1], [], []>} : vector<8x128xbf16>, vector<128x128xbf16>, vector<8x128xf32> -> vector<8x128xf32>
    %c0_6 = arith.constant 0 : index
    %c0_7 = arith.constant 0 : index
    %12 = vector.load %arg4[%c0_6, %c0_7] : memref<1x128xf32, #tpu.memory_space<vmem>>, vector<1x128xf32>
    %13 = vector.broadcast %12 : vector<1x128xf32> to vector<8x128xf32>
    %14 = arith.addf %11, %13 : vector<8x128xf32>
    %15 = arith.negf %14 : vector<8x128xf32>
    %16 = math.exp %15 : vector<8x128xf32>
    %cst_8 = arith.constant 1.000000e+00 : f32
    %17 = vector.broadcast %cst_8 : f32 to vector<8x128xf32>
    %18 = arith.addf %17, %16 : vector<8x128xf32>
    %19 = arith.divf %17, %18 : vector<8x128xf32>
    %20 = arith.mulf %14, %19 : vector<8x128xf32>
    %21 = arith.truncf %20 : vector<8x128xf32> to vector<8x128xbf16>
    %c0_9 = arith.constant 0 : index
    %c0_10 = arith.constant 0 : index
    %22 = vector.load %arg5[%c0_9, %c0_10] : memref<128x128xbf16, #tpu.memory_space<vmem>>, vector<128x128xbf16>
    %cst_11 = arith.constant dense<0.000000e+00> : vector<8x128xf32>
    %23 = tpu.matmul %21, %22, %cst_11 {dimension_numbers = #tpu.dot_dimension_numbers<[1], [0], [0], [1], [0, 0, 1, 1], [], []>} : vector<8x128xbf16>, vector<128x128xbf16>, vector<8x128xf32> -> vector<8x128xf32>
    %c0_12 = arith.constant 0 : index
    %c0_13 = arith.constant 0 : index
    %24 = vector.load %arg6[%c0_12, %c0_13] : memref<1x128xf32, #tpu.memory_space<vmem>>, vector<1x128xf32>
    %25 = vector.broadcast %24 : vector<1x128xf32> to vector<8x128xf32>
    %26 = arith.addf %23, %25 : vector<8x128xf32>
    %27 = arith.negf %26 : vector<8x128xf32>
    %28 = math.exp %27 : vector<8x128xf32>
    %cst_14 = arith.constant 1.000000e+00 : f32
    %29 = vector.broadcast %cst_14 : f32 to vector<8x128xf32>
    %30 = arith.addf %29, %28 : vector<8x128xf32>
    %31 = arith.divf %29, %30 : vector<8x128xf32>
    %32 = arith.mulf %26, %31 : vector<8x128xf32>
    %c0_15 = arith.constant 0 : index
    %c0_16 = arith.constant 0 : index
    %33 = vector.load %arg7[%c0_15, %c0_16] : memref<8x128xf32, #tpu.memory_space<vmem>>, vector<8x128xf32>
    tpu.vector_store %arg7[%c0_15, %c0_16], %32 {strides = array<i32>} : memref<8x128xf32, #tpu.memory_space<vmem>>, vector<8x128xf32>,
    return
  }
  func.func @transform_0(%arg0: i32) -> (i32, i32) {
    %c0_i32 = arith.constant 0 : i32
    %c0_i32_0 = arith.constant 0 : i32
    %c0_i32_1 = arith.constant 0 : i32
    return %c0_i32, %c0_i32_0 : i32, i32
  }
  func.func @transform_1(%arg0: i32) -> (i32, i32) {
    %c0_i32 = arith.constant 0 : i32
    %c0_i32_0 = arith.constant 0 : i32
    %c0_i32_1 = arith.constant 0 : i32
    return %c0_i32, %c0_i32_0 : i32, i32
  }
  func.func @transform_2(%arg0: i32) -> (i32, i32) {
    %c0_i32 = arith.constant 0 : i32
    %c0_i32_0 = arith.constant 0 : i32
    %c0_i32_1 = arith.constant 0 : i32
    return %c0_i32, %c0_i32_0 : i32, i32
  }
  func.func @transform_3(%arg0: i32) -> (i32, i32) {
    %c0_i32 = arith.constant 0 : i32
    %c0_i32_0 = arith.constant 0 : i32
    %c0_i32_1 = arith.constant 0 : i32
    return %c0_i32, %c0_i32_0 : i32, i32
  }
  func.func @transform_4(%arg0: i32) -> (i32, i32) {
    %c0_i32 = arith.constant 0 : i32
    %c0_i32_0 = arith.constant 0 : i32
    %c0_i32_1 = arith.constant 0 : i32
    return %c0_i32, %c0_i32_0 : i32, i32
  }
  func.func @transform_5(%arg0: i32) -> (i32, i32) {
    %c0_i32 = arith.constant 0 : i32
    %c0_i32_0 = arith.constant 0 : i32
    %c0_i32_1 = arith.constant 0 : i32
    return %c0_i32, %c0_i32_0 : i32, i32
  }
  func.func @transform_6(%arg0: i32) -> (i32, i32) {
    %c0_i32 = arith.constant 0 : i32
    %c0_i32_0 = arith.constant 0 : i32
    %c0_i32_1 = arith.constant 0 : i32
    return %c0_i32, %c0_i32_0 : i32, i32
  }
}

</mosaic_0001>

<llo_original>
// kernel: tpu_custom_call.1
$region0: #{tpu_custom_call.1}
  #allocation0 [shape = 'u32[]', space=smem, size = 0x4, offset = 0x4, fixed_abs, tag = 'smem constant byte address 0x4 - core index']
  #allocation1 [shape = 'u32[144,128]{1,0:T(1,128)}', space=vmem, size = 0x12000, scoped, tag = 'internal scratch']
  %s0 = inlined_call_operand.vmem [shape: s32[8,1], index: 0, kind: input, shape index: {}]
  %s1 = inlined_call_operand.hbm [shape: bf16[50,128], index: 1, kind: input, shape index: {}]
  %s2 = inlined_call_operand.hbm [shape: bf16[128,128], index: 2, kind: input, shape index: {}]
  %s3 = inlined_call_operand.vmem [shape: f32[1,128], index: 3, kind: input, shape index: {}]
  %s4 = inlined_call_operand.hbm [shape: bf16[128,128], index: 4, kind: input, shape index: {}]
  %s5 = inlined_call_operand.vmem [shape: f32[1,128], index: 5, kind: input, shape index: {}]
  %s6 = inlined_call_operand.hbm [shape: f32[8,128], index: 6, kind: output, shape index: {}]
  %s7 = sld [smem:[#allocation0]]
  $region46: #{tpu_custom_call.1} parent=0
    _
  %s9 = ssub.s32 1, %s7
  %s10 = scalar_select 0, %s9, %s7
  $region1: #{tpu_custom_call.1} parent=0
    #allocation2 [shape = 'u8[14336]{0}', space=vmem, size = 0x3800, scoped, tag = 'input window, operand 1, single buffered']
    #allocation3 [shape = 's32[1]{0}', space=sflag, size = 0x4, scoped, tag = 'scoped memory for tpu_custom_call.1']
    #allocation4 [shape = 's32[1]{0}', space=sflag, size = 0x4, scoped, tag = 'scoped memory for tpu_custom_call.1']
    #allocation5 [shape = 'u8[32768]{0}', space=vmem, size = 0x8000, scoped, tag = 'input window, operand 2, single buffered']
    #allocation6 [shape = 's32[1]{0}', space=sflag, size = 0x4, scoped, tag = 'scoped memory for tpu_custom_call.1']
    #allocation7 [shape = 'u8[32768]{0}', space=vmem, size = 0x8000, scoped, tag = 'input window, operand 4, single buffered']
    #allocation8 [shape = 'u8[4096]{0}', space=vmem, size = 0x1000, scoped, tag = 'output window, operand 0, single buffered']
    %11 = vsyncpa [#allocation3], 0
    %12 = vsyncpa [#allocation6], 0
    %13 = vsyncpa [#allocation4], 0
    // Predicated region
    $region2: #{tpu_custom_call.1} parent=1 // pred_check
      _
    $region3: #{tpu_custom_call.1} parent=1 // pred_check_branch
      %15 = sbr.rel (0) target = $region5
    $region4: #{tpu_custom_call.1} parent=1 // pred_region
      _
    $region5: #{tpu_custom_call.1} parent=1 // pred_fallthru
      _
    // Predicated region
    $region6: #{tpu_custom_call.1} parent=1 // pred_check
      _
    $region7: #{tpu_custom_call.1} parent=1 // pred_check_branch
      %17 = sbr.rel (0) target = $region9
    $region8: #{tpu_custom_call.1} parent=1 // pred_region
      %s19 = ssub.s32 448, 448
      %20 = vsyncadd [#allocation3], %s19
      %s21 = sshll.u32 [#allocation2], 4
      %s22 = int_to_ptr.vmem [resolvable:$true] %s21
      %27 = dma.hbm_to_vmem [thread:$0]  %s1, 448, %s22, [#allocation3], 64, 64, 4
    $region9: #{tpu_custom_call.1} parent=1 // pred_fallthru
      _
    // Predicated region
    $region10: #{tpu_custom_call.1} parent=1 // pred_check
      _
    $region11: #{tpu_custom_call.1} parent=1 // pred_check_branch
      %29 = sbr.rel (0) target = $region13
    $region12: #{tpu_custom_call.1} parent=1 // pred_region
      %s31 = ssub.s32 1024, 1024
      %32 = vsyncadd [#allocation6], %s31
      %s33 = sshll.u32 [#allocation5], 4
      %s34 = int_to_ptr.vmem [resolvable:$true] %s33
      %39 = dma.hbm_to_vmem [thread:$0]  %s2, 1024, %s34, [#allocation6], 64, 64, 4
    $region13: #{tpu_custom_call.1} parent=1 // pred_fallthru
      _
    // Predicated region
    $region14: #{tpu_custom_call.1} parent=1 // pred_check
      _
    $region15: #{tpu_custom_call.1} parent=1 // pred_check_branch
      %41 = sbr.rel (0) target = $region17
    $region16: #{tpu_custom_call.1} parent=1 // pred_region
      _
    $region17: #{tpu_custom_call.1} parent=1 // pred_fallthru
      _
    // Predicated region
    $region18: #{tpu_custom_call.1} parent=1 // pred_check
      _
    $region19: #{tpu_custom_call.1} parent=1 // pred_check_branch
      %43 = sbr.rel (0) target = $region21
    $region20: #{tpu_custom_call.1} parent=1 // pred_region
      %s45 = ssub.s32 1024, 1024
      %46 = vsyncadd [#allocation6], %s45
      %s47 = sshll.u32 [#allocation7], 4
      %s48 = int_to_ptr.vmem [resolvable:$true] %s47
      %53 = dma.hbm_to_vmem [thread:$0]  %s4, 1024, %s48, [#allocation6], 64, 64, 4
    $region21: #{tpu_custom_call.1} parent=1 // pred_fallthru
      _
    // Predicated region
    $region22: #{tpu_custom_call.1} parent=1 // pred_check
      _
    $region23: #{tpu_custom_call.1} parent=1 // pred_check_branch
      %55 = sbr.rel (0) target = $region25
    $region24: #{tpu_custom_call.1} parent=1 // pred_region
      _
    $region25: #{tpu_custom_call.1} parent=1 // pred_fallthru
      _
    // Predicated region
    $region26: #{tpu_custom_call.1} parent=1 // pred_check
      _
    $region27: #{tpu_custom_call.1} parent=1 // pred_check_branch
      %57 = sbr.rel (0) target = $region29
    $region28: #{tpu_custom_call.1} parent=1 // pred_region
      %58 = dma.done [#allocation3], 448
    $region29: #{tpu_custom_call.1} parent=1 // pred_fallthru
      _
    // Predicated region
    $region30: #{tpu_custom_call.1} parent=1 // pred_check
      _
    $region31: #{tpu_custom_call.1} parent=1 // pred_check_branch
      %60 = sbr.rel (0) target = $region33
    $region32: #{tpu_custom_call.1} parent=1 // pred_region
      %61 = dma.done [#allocation6], 1024
    $region33: #{tpu_custom_call.1} parent=1 // pred_fallthru
      _
    // Predicated region
    $region34: #{tpu_custom_call.1} parent=1 // pred_check
      _
    $region35: #{tpu_custom_call.1} parent=1 // pred_check_branch
      %63 = sbr.rel (0) target = $region37
    $region36: #{tpu_custom_call.1} parent=1 // pred_region
      %64 = dma.done [#allocation6], 1024
    $region37: #{tpu_custom_call.1} parent=1 // pred_fallthru
      _
    %v66 = vld [vmem:[%s0] sm:$0xff]
    %v67 = vlaneseq
    %v68 = vand.u32 %v67, 127
    %69 = vset.pattern.permute.xlu0 0
    %70 = vperm.xlu0 %69, %v66
    %v71 = vpop.permute.xlu0 %70
    %vm72 = vcmp.eq.s32.totalorder %v68, %v71
    %v73 = vsel %vm72, 1, 0
    %v74 = vcvt.s32.f32 %v73
    %v75 = vpack.c.bf16 %v74, %v74
    %v76 = vld [vmem:[#allocation2] sm:$0xf]
    %v77 = vld [vmem:[#allocation2 + $0x4] sm:$0xf]
    %v78 = vld [vmem:[#allocation2 + $0x8] sm:$0xf]
    %v79 = vld [vmem:[#allocation2 + $0xc] sm:$0xf]
    %v80 = vld [vmem:[#allocation2 + $0x10] sm:$0xf]
    %v81 = vld [vmem:[#allocation2 + $0x14] sm:$0xf]
    %v82 = vld [vmem:[#allocation2 + $0x18] sm:$0x1]
    %v90 = vunpack.c.l.b16 %v76
    %v91 = vunpack.c.l.b16 %v77
    %v92 = vunpack.c.l.b16 %v78
    %v93 = vunpack.c.l.b16 %v79
    %v94 = vunpack.c.l.b16 %v80
    %v95 = vunpack.c.l.b16 %v81
    %v96 = vunpack.c.l.b16 %v82
    %v97 = vpack.c.b16 %v91, %v90
    %v98 = vpack.c.b16 %v93, %v92
    %v99 = vpack.c.b16 %v95, %v94
    %v100 = vpack.c.b16 %v96, %v96
    %vm104 = vcmask 408576
    %v106 = vsel %vm104, %v75, 0
    %vm108 = vcmask 1040384
    %v110 = vsel %vm108, %v100, 0
    %112 = vmatprep.subr.bf16.mxu0 0
    %113 = vmatpush1.bf16.msra.mxu0 %v97
    %114 = vmatprep.subr.bf16.mxu0 0
    %115 = vmatpush1.bf16.msra.mxu0 %v98
    %116 = vmatprep.subr.bf16.mxu0 0
    %117 = vmatpush1.bf16.msra.mxu0 %v99
    %118 = vmatprep.subr.bf16.mxu0 0
    %119 = vmatpush1.bf16.msra.mxu0 %v110
    %120 = vmatprep.subr.bf16.mxu0 0
    %121 = vmatpush1.bf16.msra.mxu0 0
    %122 = vmatprep.subr.bf16.mxu0 0
    %123 = vmatpush1.bf16.msra.mxu0 0
    %124 = vmatprep.subr.bf16.mxu0 0
    %125 = vmatpush1.bf16.msra.mxu0 0
    %126 = vmatprep.subr.bf16.mxu0 0
    %127 = vmatpush1.bf16.msra.mxu0 0
    %128 = vmatprep.subr.bf16.mxu0 0
    %129 = vmatpush1.bf16.msra.mxu0 0
    %130 = vmatprep.subr.bf16.mxu0 0
    %131 = vmatpush1.bf16.msra.mxu0 0
    %132 = vmatprep.subr.bf16.mxu0 0
    %133 = vmatpush1.bf16.msra.mxu0 0
    %134 = vmatprep.subr.bf16.mxu0 0
    %135 = vmatpush1.bf16.msra.mxu0 0
    %136 = vmatprep.subr.bf16.mxu0 0
    %137 = vmatpush1.bf16.msra.mxu0 0
    %138 = vmatprep.subr.bf16.mxu0 0
    %139 = vmatpush1.bf16.msra.mxu0 0
    %140 = vmatprep.subr.bf16.mxu0 0
    %141 = vmatpush1.bf16.msra.mxu0 0
    %142 = vmatprep.subr.bf16.mxu0 0
    %143 = vmatpush1.bf16.msra.mxu0 0
    %144 = vmatprep.mubr.bf16.mxu0 0
    %145 = vmatmul.mubr.bf16.gmra.mrb[0].mxu0 %v106
    %v146 = vpop.f32.mrb[0].mxu0
    %v147 = vadd.f32 0.0, %v146
    %v148 = vpop.f32.mrb[0].mxu0
    %v149 = vpop.f32.mrb[0].mxu0
    %v150 = vpop.f32.mrb[0].mxu0
    %151 = vdwg.mxu0
    %v152 = vpack.c.bf16 %v147, %v147
    %v153 = vld [vmem:[#allocation5] sm:$0xf]
    %v154 = vld [vmem:[#allocation5 + $0x4] sm:$0xf]
    %v155 = vld [vmem:[#allocation5 + $0x8] sm:$0xf]
    %v156 = vld [vmem:[#allocation5 + $0xc] sm:$0xf]
    %v157 = vld [vmem:[#allocation5 + $0x10] sm:$0xf]
    %v158 = vld [vmem:[#allocation5 + $0x14] sm:$0xf]
    %v159 = vld [vmem:[#allocation5 + $0x18] sm:$0xf]
    %v160 = vld [vmem:[#allocation5 + $0x1c] sm:$0xf]
    %v161 = vld [vmem:[#allocation5 + $0x20] sm:$0xf]
    %v162 = vld [vmem:[#allocation5 + $0x24] sm:$0xf]
    %v163 = vld [vmem:[#allocation5 + $0x28] sm:$0xf]
    %v164 = vld [vmem:[#allocation5 + $0x2c] sm:$0xf]
    %v165 = vld [vmem:[#allocation5 + $0x30] sm:$0xf]
    %v166 = vld [vmem:[#allocation5 + $0x34] sm:$0xf]
    %v167 = vld [vmem:[#allocation5 + $0x38] sm:$0xf]
    %v168 = vld [vmem:[#allocation5 + $0x3c] sm:$0xf]
    %v169 = vld [vmem:[%s3] sm:$0x1]
    %v171 = vlaneseq
    %v172 = vshrl.u32 %v171, 7
    %v173 = vsub.s32 0, %v172
    %v174 = vrot.slane %v169, %v173
    %v192 = vunpack.c.l.b16 %v153
    %v193 = vunpack.c.l.b16 %v154
    %v194 = vunpack.c.l.b16 %v155
    %v195 = vunpack.c.l.b16 %v156
    %v196 = vunpack.c.l.b16 %v157
    %v197 = vunpack.c.l.b16 %v158
    %v198 = vunpack.c.l.b16 %v159
    %v199 = vunpack.c.l.b16 %v160
    %v200 = vunpack.c.l.b16 %v161
    %v201 = vunpack.c.l.b16 %v162
    %v202 = vunpack.c.l.b16 %v163
    %v203 = vunpack.c.l.b16 %v164
    %v204 = vunpack.c.l.b16 %v165
    %v205 = vunpack.c.l.b16 %v166
    %v206 = vunpack.c.l.b16 %v167
    %v207 = vunpack.c.l.b16 %v168
    %v208 = vpack.c.b16 %v193, %v192
    %v209 = vpack.c.b16 %v195, %v194
    %v210 = vpack.c.b16 %v197, %v196
    %v211 = vpack.c.b16 %v199, %v198
    %v212 = vpack.c.b16 %v201, %v200
    %v213 = vpack.c.b16 %v203, %v202
    %v214 = vpack.c.b16 %v205, %v204
    %v215 = vpack.c.b16 %v207, %v206
    %224 = vmatprep.subr.bf16.mxu0 0
    %225 = vmatpush1.bf16.msra.mxu0 %v208
    %226 = vmatprep.subr.bf16.mxu0 0
    %227 = vmatpush1.bf16.msra.mxu0 %v209
    %228 = vmatprep.subr.bf16.mxu0 0
    %229 = vmatpush1.bf16.msra.mxu0 %v210
    %230 = vmatprep.subr.bf16.mxu0 0
    %231 = vmatpush1.bf16.msra.mxu0 %v211
    %232 = vmatprep.subr.bf16.mxu0 0
    %233 = vmatpush1.bf16.msra.mxu0 %v212
    %234 = vmatprep.subr.bf16.mxu0 0
    %235 = vmatpush1.bf16.msra.mxu0 %v213
    %236 = vmatprep.subr.bf16.mxu0 0
    %237 = vmatpush1.bf16.msra.mxu0 %v214
    %238 = vmatprep.subr.bf16.mxu0 0
    %239 = vmatpush1.bf16.msra.mxu0 %v215
    %240 = vmatprep.subr.bf16.mxu0 0
    %241 = vmatpush1.bf16.msra.mxu0 0
    %242 = vmatprep.subr.bf16.mxu0 0
    %243 = vmatpush1.bf16.msra.mxu0 0
    %244 = vmatprep.subr.bf16.mxu0 0
    %245 = vmatpush1.bf16.msra.mxu0 0
    %246 = vmatprep.subr.bf16.mxu0 0
    %247 = vmatpush1.bf16.msra.mxu0 0
    %248 = vmatprep.subr.bf16.mxu0 0
    %249 = vmatpush1.bf16.msra.mxu0 0
    %250 = vmatprep.subr.bf16.mxu0 0
    %251 = vmatpush1.bf16.msra.mxu0 0
    %252 = vmatprep.subr.bf16.mxu0 0
    %253 = vmatpush1.bf16.msra.mxu0 0
    %254 = vmatprep.subr.bf16.mxu0 0
    %255 = vmatpush1.bf16.msra.mxu0 0
    %256 = vmatprep.mubr.bf16.mxu0 0
    %257 = vmatmul.mubr.bf16.gmra.mrb[0].mxu0 %v152
    %v258 = vpop.f32.mrb[0].mxu0
    %v259 = vadd.f32 %v174, %v258
    %v260 = vpop.f32.mrb[0].mxu0
    %v261 = vpop.f32.mrb[0].mxu0
    %v262 = vpop.f32.mrb[0].mxu0
    %263 = vdwg.mxu0
    %v264 = vxor.u32 %v259, 2147483648
    %v265 = vmul.f32 %v264, 1.442695
    %v266 = vpow.pop %v265
    %v267 = vadd.f32 %v266, 1.0
    %v268 = vrcp.pop %v267
    %v269 = vmul.f32 1.0, %v268
    %v270 = vmul.f32 %v259, %v269
    %v271 = vpack.c.bf16 %v270, %v270
    %v272 = vld [vmem:[#allocation7] sm:$0xf]
    %v273 = vld [vmem:[#allocation7 + $0x4] sm:$0xf]
    %v274 = vld [vmem:[#allocation7 + $0x8] sm:$0xf]
    %v275 = vld [vmem:[#allocation7 + $0xc] sm:$0xf]
    %v276 = vld [vmem:[#allocation7 + $0x10] sm:$0xf]
    %v277 = vld [vmem:[#allocation7 + $0x14] sm:$0xf]
    %v278 = vld [vmem:[#allocation7 + $0x18] sm:$0xf]
    %v279 = vld [vmem:[#allocation7 + $0x1c] sm:$0xf]
    %v280 = vld [vmem:[#allocation7 + $0x20] sm:$0xf]
    %v281 = vld [vmem:[#allocation7 + $0x24] sm:$0xf]
    %v282 = vld [vmem:[#allocation7 + $0x28] sm:$0xf]
    %v283 = vld [vmem:[#allocation7 + $0x2c] sm:$0xf]
    %v284 = vld [vmem:[#allocation7 + $0x30] sm:$0xf]
    %v285 = vld [vmem:[#allocation7 + $0x34] sm:$0xf]
    %v286 = vld [vmem:[#allocation7 + $0x38] sm:$0xf]
    %v287 = vld [vmem:[#allocation7 + $0x3c] sm:$0xf]
    %v288 = vld [vmem:[%s5] sm:$0x1]
    %v290 = vlaneseq
    %v291 = vshrl.u32 %v290, 7
    %v292 = vsub.s32 0, %v291
    %v293 = vrot.slane %v288, %v292
    %v311 = vunpack.c.l.b16 %v272
    %v312 = vunpack.c.l.b16 %v273
    %v313 = vunpack.c.l.b16 %v274
    %v314 = vunpack.c.l.b16 %v275
    %v315 = vunpack.c.l.b16 %v276
    %v316 = vunpack.c.l.b16 %v277
    %v317 = vunpack.c.l.b16 %v278
    %v318 = vunpack.c.l.b16 %v279
    %v319 = vunpack.c.l.b16 %v280
    %v320 = vunpack.c.l.b16 %v281
    %v321 = vunpack.c.l.b16 %v282
    %v322 = vunpack.c.l.b16 %v283
    %v323 = vunpack.c.l.b16 %v284
    %v324 = vunpack.c.l.b16 %v285
    %v325 = vunpack.c.l.b16 %v286
    %v326 = vunpack.c.l.b16 %v287
    %v327 = vpack.c.b16 %v312, %v311
    %v328 = vpack.c.b16 %v314, %v313
    %v329 = vpack.c.b16 %v316, %v315
    %v330 = vpack.c.b16 %v318, %v317
    %v331 = vpack.c.b16 %v320, %v319
    %v332 = vpack.c.b16 %v322, %v321
    %v333 = vpack.c.b16 %v324, %v323
    %v334 = vpack.c.b16 %v326, %v325
    %343 = vmatprep.subr.bf16.mxu0 0
    %344 = vmatpush1.bf16.msra.mxu0 %v327
    %345 = vmatprep.subr.bf16.mxu0 0
    %346 = vmatpush1.bf16.msra.mxu0 %v328
    %347 = vmatprep.subr.bf16.mxu0 0
    %348 = vmatpush1.bf16.msra.mxu0 %v329
    %349 = vmatprep.subr.bf16.mxu0 0
    %350 = vmatpush1.bf16.msra.mxu0 %v330
    %351 = vmatprep.subr.bf16.mxu0 0
    %352 = vmatpush1.bf16.msra.mxu0 %v331
    %353 = vmatprep.subr.bf16.mxu0 0
    %354 = vmatpush1.bf16.msra.mxu0 %v332
    %355 = vmatprep.subr.bf16.mxu0 0
    %356 = vmatpush1.bf16.msra.mxu0 %v333
    %357 = vmatprep.subr.bf16.mxu0 0
    %358 = vmatpush1.bf16.msra.mxu0 %v334
    %359 = vmatprep.subr.bf16.mxu0 0
    %360 = vmatpush1.bf16.msra.mxu0 0
    %361 = vmatprep.subr.bf16.mxu0 0
    %362 = vmatpush1.bf16.msra.mxu0 0
    %363 = vmatprep.subr.bf16.mxu0 0
    %364 = vmatpush1.bf16.msra.mxu0 0
    %365 = vmatprep.subr.bf16.mxu0 0
    %366 = vmatpush1.bf16.msra.mxu0 0
    %367 = vmatprep.subr.bf16.mxu0 0
    %368 = vmatpush1.bf16.msra.mxu0 0
    %369 = vmatprep.subr.bf16.mxu0 0
    %370 = vmatpush1.bf16.msra.mxu0 0
    %371 = vmatprep.subr.bf16.mxu0 0
    %372 = vmatpush1.bf16.msra.mxu0 0
    %373 = vmatprep.subr.bf16.mxu0 0
    %374 = vmatpush1.bf16.msra.mxu0 0
    %375 = vmatprep.mubr.bf16.mxu0 0
    %376 = vmatmul.mubr.bf16.gmra.mrb[0].mxu0 %v271
    %v377 = vpop.f32.mrb[0].mxu0
    %v378 = vadd.f32 %v293, %v377
    %v379 = vpop.f32.mrb[0].mxu0
    %v380 = vpop.f32.mrb[0].mxu0
    %v381 = vpop.f32.mrb[0].mxu0
    %382 = vdwg.mxu0
    %v383 = vxor.u32 %v378, 2147483648
    %v384 = vmul.f32 %v383, 1.442695
    %v385 = vpow.pop %v384
    %v386 = vadd.f32 %v385, 1.0
    %v387 = vrcp.pop %v386
    %v388 = vmul.f32 1.0, %v387
    %v389 = vmul.f32 %v378, %v388
    %390 = vst [vmem:[#allocation8] sm:$0xff] %v389
    // Predicated region
    $region38: #{tpu_custom_call.1} parent=1 // pred_check
      _
    $region39: #{tpu_custom_call.1} parent=1 // pred_check_branch
      %392 = sbr.rel (0) target = $region41
    $region40: #{tpu_custom_call.1} parent=1 // pred_region
      %s394 = ssub.s32 128, 128
      %395 = vsyncadd [#allocation4], %s394
      %s397 = sshll.u32 [#allocation8], 4
      %s398 = int_to_ptr.vmem [resolvable:$true] %s397
      %400 = dma.vmem_to_hbm [thread:$0]  %s398, 128, %s6, [#allocation4]
    $region41: #{tpu_custom_call.1} parent=1 // pred_fallthru
      _
    // Predicated region
    $region42: #{tpu_custom_call.1} parent=1 // pred_check
      _
    $region43: #{tpu_custom_call.1} parent=1 // pred_check_branch
      %402 = sbr.rel (0) target = $region45
    $region44: #{tpu_custom_call.1} parent=1 // pred_region
      %403 = dma.done [#allocation4], 128
    $region45: #{tpu_custom_call.1} parent=1 // pred_fallthru
      _
    %404 = vsyncpa [#allocation3], 1
    %405 = vsyncpa [#allocation6], 1
    %406 = vsyncpa [#allocation4], 1

</llo_original>
